<compile_context>
chip_gen: v7x
topology: tpu7x:2x2x1
jax: 0.10.0
libtpu: 0.0.40
codegen_flags: <defaults>
</compile_context>

<pallas_src>
import jax
import jax.numpy as jnp
from jax.experimental import pallas as pl
from jax.experimental.pallas import tpu as pltpu

LEAK = 0.2          # LeakyReLU negative slope
LN_EPS = 1e-5       # PyTorch LayerNorm default eps
KSIZE = 4           # n_filters = 2*padd + 2 with padd=1
STRIDE = 2
PAD = 1
OUT_CH = 64         # every critic block outputs 64 channels
B_TILE_MAX = 128    # samples per grid step (lane-dense output row)


def _const_spec(shape):
    """Whole-array VMEM block, identical for every grid step."""
    zeros = (0,) * len(shape)
    return pl.BlockSpec(shape, lambda i, _z=zeros: _z)


def _layer_norm(y, gamma, beta):
    """Per-sample LayerNorm over the (L, C) slab of a (B, L, C) tile.

    Two-step minor-axis reductions (axis 2 then axis 1) keep the lowering on
    plain lane / sublane reduce paths; equal group sizes make the mean-of-means
    exact.
    """
    mean = jnp.mean(jnp.mean(y, axis=2, keepdims=True), axis=1, keepdims=True)
    d = y - mean
    var = jnp.mean(jnp.mean(d * d, axis=2, keepdims=True), axis=1, keepdims=True)
    return d * jax.lax.rsqrt(var + LN_EPS) * gamma + beta


def _build_fused_forward(x_dim, traj_len, b_tile, grid_steps):
    """One fused pallas_call for the whole Critic forward (all blocks + adv)."""
    n_blocks = 3 if traj_len == 64 else 2

    lens = []                          # per-block input length (unpadded)
    l = traj_len
    for _ in range(n_blocks):
        lens.append(l)
        l //= 2
    l_last = l                         # length after the final block
    l0 = lens[0] // 2                  # first block's output length
    k0 = KSIZE * x_dim                 # first block's fused contraction depth
    chans = [x_dim] + [OUT_CH] * (n_blocks - 1)

    def kernel(*refs):
        p0_ref = refs[0]                                   # (B, l0, k0) host im2col patches
        blk_refs = [refs[1 + 4 * b: 1 + 4 * (b + 1)] for b in range(n_blocks)]
        wf_ref = refs[1 + 4 * n_blocks]                    # (l_last, 64) folded adv weight
        ab_ref = refs[2 + 4 * n_blocks]                    # (1, B) adv bias (lane broadcast)
        out_ref = refs[3 + 4 * n_blocks]                   # (1, B) validity row
        bufs = refs[4 + 4 * n_blocks:]                     # padded-activation VMEM scratch

        # ---- block 0: conv fused into one (B*l0, 4*x_dim) @ (4*x_dim, 64) matmul.
        w_ref, b_ref, g_ref, bt_ref = blk_refs[0]
        p = p0_ref[...].reshape(b_tile * l0, k0)
        h = jnp.dot(p, w_ref[...], preferred_element_type=jnp.float32) + b_ref[...]
        h = jnp.where(h > 0, h, LEAK * h)                  # LeakyReLU(0.2)
        # TODO(synk): Dropout(0.2) treated as identity (inference mode); no RNG mask.
        y = _layer_norm(h.reshape(b_tile, l0, OUT_CH), g_ref[...], bt_ref[...])

        # ---- remaining blocks: stage padded activations in VMEM scratch, build
        #      the im2col patch tile from 4 stride-2 tap slices, and run ONE
        #      (B*l_out, 256) @ (256, 64) matmul (K fills the MXU contraction).
        for b in range(1, n_blocks):
            l_in = lens[b]
            l_out = l_in // 2
            buf = bufs[b - 1]                              # (B, l_in + 2, 64)
            # Pad rows rewritten every step: scratch is per-core and
            # uninitialized; a program_id==0 guard would leave the second
            # TensorCore's pads garbage under megacore sharding.
            buf[:, 0:1, :] = jnp.zeros((b_tile, 1, OUT_CH), jnp.float32)
            buf[:, l_in + 1:l_in + 2, :] = jnp.zeros((b_tile, 1, OUT_CH), jnp.float32)
            buf[:, 1:l_in + 1, :] = y

            w_ref, b_ref, g_ref, bt_ref = blk_refs[b]
            taps = [buf[:, pl.ds(k, l_out, stride=STRIDE), :] for k in range(KSIZE)]
            patches = jnp.concatenate(taps, axis=-1)       # (B, l_out, 4*64)
            p = patches.reshape(b_tile * l_out, KSIZE * OUT_CH)
            h = jnp.dot(p, w_ref[...], preferred_element_type=jnp.float32) + b_ref[...]
            h = jnp.where(h > 0, h, LEAK * h)
            y = _layer_norm(h.reshape(b_tile, l_out, OUT_CH), g_ref[...], bt_ref[...])

        # ---- fused adv_layer: flatten permutation folded into wf on the host.
        v = jnp.sum(jnp.sum(y * wf_ref[...], axis=2), axis=1)     # (B,)
        out_ref[...] = v.reshape(1, b_tile) + ab_ref[...]

    # ---- specs --------------------------------------------------------------
    in_specs = [pl.BlockSpec((b_tile, l0, k0), lambda i: (i, 0, 0))]
    for b in range(n_blocks):
        l_out_b = lens[b] // 2
        in_specs += [
            _const_spec((KSIZE * chans[b], OUT_CH)),   # fused conv weight, tap-major
            _const_spec((1, OUT_CH)),                  # conv bias
            _const_spec((l_out_b, OUT_CH)),            # LN gamma, (L, C) layout
            _const_spec((l_out_b, OUT_CH)),            # LN beta,  (L, C) layout
        ]
    in_specs += [_const_spec((l_last, OUT_CH)),        # folded adv weight
                 _const_spec((1, b_tile))]             # adv bias, lane-broadcast

    scratch_shapes = [pltpu.VMEM((b_tile, lens[b] + 2 * PAD, OUT_CH), jnp.float32)
                      for b in range(1, n_blocks)]

    n_pad = b_tile * grid_steps
    conv_flops = sum(2 * (lens[b] // 2) * OUT_CH * KSIZE * chans[b]
                     for b in range(n_blocks))
    flops = n_pad * (conv_flops + 2 * l_last * OUT_CH)
    param_bytes = 4 * sum(KSIZE * chans[b] * OUT_CH + OUT_CH
                          + 2 * (lens[b] // 2) * OUT_CH for b in range(n_blocks))
    bytes_accessed = (4 * n_pad * l0 * k0 + param_bytes
                      + 4 * (l_last * OUT_CH + b_tile) + 4 * n_pad)

    return pl.pallas_call(
        kernel,
        out_shape=jax.ShapeDtypeStruct((grid_steps, 1, b_tile), jnp.float32),
        grid=(grid_steps,),
        in_specs=in_specs,
        out_specs=pl.BlockSpec((None, 1, b_tile), lambda i: (i, 0, 0)),
        scratch_shapes=scratch_shapes,
        compiler_params=pltpu.CompilerParams(dimension_semantics=("parallel",)),
        cost_estimate=pl.CostEstimate(flops=flops,
                                      transcendentals=n_pad * n_blocks,
                                      bytes_accessed=bytes_accessed),
    )


# ---------------------------------------------------------------------------
# Host-side wrapper (layout plumbing only)
# ---------------------------------------------------------------------------
def critic_forward(params, trajs, conditions, *, b_tile=B_TILE_MAX):
    """Critic.forward(trajs, conditions) -> validity of shape (N, 1)."""
    # torch.cat((conditions, trajs), 2): concatenate along the length axis (NCL).
    x = jnp.concatenate([conditions, trajs], axis=2)         # (N, x_dim, traj_len)
    n, x_dim, traj_len = x.shape
    n_blocks = 3 if traj_len == 64 else 2
    assert len(params["blocks"]) == n_blocks
    l0 = traj_len // 2
    l_last = traj_len // (2 ** n_blocks)

    # Host-side im2col for the FIRST block only (C_in = x_dim is tiny; this is a
    # negligible XLA gather and gives the kernel a lane-denser first operand).
    xpad = jnp.pad(x, ((0, 0), (0, 0), (PAD, PAD)))           # (N, C, L+2)
    taps = [xpad[:, :, k:k + 2 * l0:2] for k in range(KSIZE)]  # each (N, C, l0)
    p0 = jnp.stack(taps, axis=1)                              # (N, K, C, l0)
    p0 = jnp.transpose(p0, (0, 3, 1, 2)).reshape(n, l0, KSIZE * x_dim)

    # Batch tiling: B_TILE samples per grid step; batch padded to a multiple.
    b_tile = max(1, min(b_tile, n))
    grid_steps = pl.cdiv(n, b_tile)
    n_pad = grid_steps * b_tile
    if n_pad != n:
        p0 = jnp.pad(p0, ((0, n_pad - n), (0, 0), (0, 0)))

    blk_args = []
    for blk in params["blocks"]:
        c_in = blk["w"].shape[1]
        blk_args += [
            # (64, C_in, K) -> (K, C_in, 64) -> (K*C_in, 64): fused im2col weight.
            jnp.transpose(blk["w"], (2, 1, 0)).reshape(KSIZE * c_in, OUT_CH),
            blk["b"].reshape(1, OUT_CH),
            blk["gamma"].T,                                    # (L, 64)
            blk["beta"].T,                                     # (L, 64)
        ]
    # Fold torch's channel-major flatten (out.view(N, -1)) into the adv weight.
    wf = params["adv_w"].reshape(OUT_CH, l_last).T             # (l_last, 64)
    ab = jnp.broadcast_to(params["adv_b"].reshape(1, 1), (1, b_tile))

    fused = _build_fused_forward(x_dim, traj_len, b_tile, grid_steps)
    out = fused(p0, *blk_args, wf, ab)                         # (G, 1, B_TILE)
    return out[:, 0, :].reshape(-1)[:n].reshape(n, 1)


# ---------------------------------------------------------------------------
# Parameters + pure-JAX reference (for the correctness check)
# ---------------------------------------------------------------------------
def init_critic_params(key, x_dim, traj_len):
    """Deterministic synthetic parameters matching the torch module's shapes."""
    n_blocks = 3 if traj_len == 64 else 2
    keys = jax.random.split(key, n_blocks + 1)
    params = {"blocks": []}
    in_f, length = x_dim, traj_len
    for i in range(n_blocks):
        length = length // 2
        kw, kb, kg, kbt = jax.random.split(keys[i], 4)
        params["blocks"].append(dict(
            w=0.1 * jax.random.normal(kw, (64, in_f, KSIZE), jnp.float32),       # Conv1d weight
            b=0.1 * jax.random.normal(kb, (64,), jnp.float32),                   # Conv1d bias
            gamma=1.0 + 0.1 * jax.random.normal(kg, (64, length), jnp.float32),  # LN weight
            beta=0.1 * jax.random.normal(kbt, (64, length), jnp.float32),        # LN bias
        ))
        in_f = 64
    ds_size = (traj_len + 1) // (2 ** n_blocks)
    ka, kab = jax.random.split(keys[-1], 2)
    params["adv_w"] = 0.1 * jax.random.normal(ka, (1, 64 * ds_size), jnp.float32)
    params["adv_b"] = 0.1 * jax.random.normal(kab, (1,), jnp.float32)
    return params


def _im2col_ref(x):
    """x: (N, C, L) -> patches (N, Lout, C*K); reference-only helper."""
    n, c, length = x.shape
    lout = (length + 2 * PAD - KSIZE) // STRIDE + 1
    xpad = jnp.pad(x, ((0, 0), (0, 0), (PAD, PAD)))
    cols = [xpad[:, :, STRIDE * l: STRIDE * l + KSIZE] for l in range(lout)]
    patches = jnp.stack(cols, axis=1)                          # (N, Lout, C, K)
    return patches.reshape(n, lout, c * KSIZE)


def critic_forward_ref(params, trajs, conditions):
    """Pure-JAX reference (same math, no Pallas) for a sanity check."""
    x = jnp.concatenate([conditions, trajs], axis=2)
    for blk in params["blocks"]:
        patches = _im2col_ref(x)
        w_mat = jnp.transpose(blk["w"], (1, 2, 0)).reshape(patches.shape[2], 64)
        y = jnp.einsum("nlc,cf->nlf", patches, w_mat) + blk["b"][None, None, :]
        y = jnp.where(y > 0, y, LEAK * y)
        mean = jnp.mean(y, axis=(1, 2), keepdims=True)
        var = jnp.mean((y - mean) ** 2, axis=(1, 2), keepdims=True)
        y = (y - mean) / jnp.sqrt(var + LN_EPS)
        y = y * blk["gamma"].T[None] + blk["beta"].T[None]
        x = jnp.transpose(y, (0, 2, 1))
    out_flat = x.reshape(x.shape[0], -1)
    return out_flat @ params["adv_w"].T + params["adv_b"][None, :]


if __name__ == "__main__":
    key = jax.random.PRNGKey(0)
    kp, kt, kc = jax.random.split(key, 3)

    x_dim, traj_len = 4, 16                 # traj_len != 64 -> 2 critic blocks
    cond_len = traj_len // 2
    batch = 2

    params = init_critic_params(kp, x_dim, traj_len)
    trajs = jax.random.normal(kt, (batch, x_dim, traj_len - cond_len), jnp.float32)
    conditions = jax.random.normal(kc, (batch, x_dim, cond_len), jnp.float32)

    out = jax.block_until_ready(critic_forward(params, trajs, conditions))

    ref = critic_forward_ref(params, trajs, conditions)
    assert out.shape == (batch, 1), out.shape
    assert jnp.allclose(out, ref, atol=1e-4, rtol=1e-4), (out, ref)
    print("KERNEL_OK")
</pallas_src>

<mosaic_0001>
module attributes {stable_mosaic.version = 11 : i64} {
  func.func @kernel(%arg0: i32, %arg1: memref<2x8x16xf32, #tpu.memory_space<vmem>>, %arg2: memref<16x64xf32, #tpu.memory_space<vmem>>, %arg3: memref<1x64xf32, #tpu.memory_space<vmem>>, %arg4: memref<8x64xf32, #tpu.memory_space<vmem>>, %arg5: memref<8x64xf32, #tpu.memory_space<vmem>>, %arg6: memref<256x64xf32, #tpu.memory_space<vmem>>, %arg7: memref<1x64xf32, #tpu.memory_space<vmem>>, %arg8: memref<4x64xf32, #tpu.memory_space<vmem>>, %arg9: memref<4x64xf32, #tpu.memory_space<vmem>>, %arg10: memref<4x64xf32, #tpu.memory_space<vmem>>, %arg11: memref<1x2xf32, #tpu.memory_space<vmem>>, %arg12: memref<1x1x2xf32, #tpu.memory_space<vmem>>, %arg13: memref<2x10x64xf32, #tpu.memory_space<vmem>>) attributes {dimension_semantics = [#tpu.dimension_semantics<parallel>], iteration_bounds = array<i64: 1>, scalar_prefetch = 0 : i64, scratch_operands = 1 : i64, tpu.core_type = #tpu.core_type<tc>, window_params = [{transform_indices = @transform_0, window_bounds = array<i64: 2, 8, 16>}, {pipeline_mode = #tpu.pipeline_mode<synchronous>, transform_indices = @transform_1, window_bounds = array<i64: 16, 64>}, {pipeline_mode = #tpu.pipeline_mode<synchronous>, transform_indices = @transform_2, window_bounds = array<i64: 1, 64>}, {pipeline_mode = #tpu.pipeline_mode<synchronous>, transform_indices = @transform_3, window_bounds = array<i64: 8, 64>}, {pipeline_mode = #tpu.pipeline_mode<synchronous>, transform_indices = @transform_4, window_bounds = array<i64: 8, 64>}, {pipeline_mode = #tpu.pipeline_mode<synchronous>, transform_indices = @transform_5, window_bounds = array<i64: 256, 64>}, {pipeline_mode = #tpu.pipeline_mode<synchronous>, transform_indices = @transform_6, window_bounds = array<i64: 1, 64>}, {pipeline_mode = #tpu.pipeline_mode<synchronous>, transform_indices = @transform_7, window_bounds = array<i64: 4, 64>}, {pipeline_mode = #tpu.pipeline_mode<synchronous>, transform_indices = @transform_8, window_bounds = array<i64: 4, 64>}, {pipeline_mode = #tpu.pipeline_mode<synchronous>, transform_indices = @transform_9, window_bounds = array<i64: 4, 64>}, {pipeline_mode = #tpu.pipeline_mode<synchronous>, transform_indices = @transform_10, window_bounds = array<i64: 1, 2>}, {transform_indices = @transform_11, window_bounds = array<i64: 1, 1, 2>}]} {
    %c0 = arith.constant 0 : index
    %c0_0 = arith.constant 0 : index
    %c0_1 = arith.constant 0 : index
    %0 = vector.load %arg1[%c0, %c0_0, %c0_1] : memref<2x8x16xf32, #tpu.memory_space<vmem>>, vector<2x8x16xf32>
    %1 = vector.shape_cast %0 : vector<2x8x16xf32> to vector<16x16xf32>
    %c0_2 = arith.constant 0 : index
    %c0_3 = arith.constant 0 : index
    %2 = vector.load %arg2[%c0_2, %c0_3] : memref<16x64xf32, #tpu.memory_space<vmem>>, vector<16x64xf32>
    %cst = arith.constant dense<0.000000e+00> : vector<16x64xf32>
    %3 = tpu.matmul %1, %2, %cst {dimension_numbers = #tpu.dot_dimension_numbers<[1], [0], [0], [1], [0, 0, 1, 1], [], []>} : vector<16x16xf32>, vector<16x64xf32>, vector<16x64xf32> -> vector<16x64xf32>
    %c0_4 = arith.constant 0 : index
    %c0_5 = arith.constant 0 : index
    %4 = vector.load %arg3[%c0_4, %c0_5] : memref<1x64xf32, #tpu.memory_space<vmem>>, vector<1x64xf32>
    %5 = vector.broadcast %4 : vector<1x64xf32> to vector<16x64xf32>
    %6 = arith.addf %3, %5 : vector<16x64xf32>
    %cst_6 = arith.constant 0.000000e+00 : f32
    %7 = vector.broadcast %cst_6 : f32 to vector<16x64xf32>
    %8 = arith.cmpf ogt, %6, %7 : vector<16x64xf32>
    %cst_7 = arith.constant 2.000000e-01 : f32
    %9 = vector.broadcast %cst_7 : f32 to vector<16x64xf32>
    %10 = arith.mulf %9, %6 : vector<16x64xf32>
    %11 = arith.select %8, %6, %10 : vector<16x64xi1>, vector<16x64xf32>
    %12 = vector.shape_cast %11 : vector<16x64xf32> to vector<2x8x64xf32>
    %c0_8 = arith.constant 0 : index
    %c0_9 = arith.constant 0 : index
    %13 = vector.load %arg4[%c0_8, %c0_9] : memref<8x64xf32, #tpu.memory_space<vmem>>, vector<8x64xf32>
    %c0_10 = arith.constant 0 : index
    %c0_11 = arith.constant 0 : index
    %14 = vector.load %arg5[%c0_10, %c0_11] : memref<8x64xf32, #tpu.memory_space<vmem>>, vector<8x64xf32>
    %cst_12 = arith.constant dense<0.000000e+00> : vector<2x8xf32>
    %15 = vector.multi_reduction <add>, %12, %cst_12 [2] : vector<2x8x64xf32> to vector<2x8xf32>
    %16 = vector.shape_cast %15 : vector<2x8xf32> to vector<2x8x1xf32>
    %cst_13 = arith.constant 6.400000e+01 : f32
    %17 = vector.broadcast %cst_13 : f32 to vector<2x8x1xf32>
    %18 = arith.divf %16, %17 : vector<2x8x1xf32>
    %cst_14 = arith.constant dense<0.000000e+00> : vector<2x1xf32>
    %19 = vector.multi_reduction <add>, %18, %cst_14 [1] : vector<2x8x1xf32> to vector<2x1xf32>
    %20 = vector.shape_cast %19 : vector<2x1xf32> to vector<2x1x1xf32>
    %cst_15 = arith.constant 8.000000e+00 : f32
    %21 = vector.broadcast %cst_15 : f32 to vector<2x1x1xf32>
    %22 = arith.divf %20, %21 : vector<2x1x1xf32>
    %23 = vector.broadcast %22 : vector<2x1x1xf32> to vector<2x8x64xf32>
    %24 = arith.subf %12, %23 : vector<2x8x64xf32>
    %25 = arith.mulf %24, %24 : vector<2x8x64xf32>
    %cst_16 = arith.constant dense<0.000000e+00> : vector<2x8xf32>
    %26 = vector.multi_reduction <add>, %25, %cst_16 [2] : vector<2x8x64xf32> to vector<2x8xf32>
    %27 = vector.shape_cast %26 : vector<2x8xf32> to vector<2x8x1xf32>
    %cst_17 = arith.constant 6.400000e+01 : f32
    %28 = vector.broadcast %cst_17 : f32 to vector<2x8x1xf32>
    %29 = arith.divf %27, %28 : vector<2x8x1xf32>
    %cst_18 = arith.constant dense<0.000000e+00> : vector<2x1xf32>
    %30 = vector.multi_reduction <add>, %29, %cst_18 [1] : vector<2x8x1xf32> to vector<2x1xf32>
    %31 = vector.shape_cast %30 : vector<2x1xf32> to vector<2x1x1xf32>
    %cst_19 = arith.constant 8.000000e+00 : f32
    %32 = vector.broadcast %cst_19 : f32 to vector<2x1x1xf32>
    %33 = arith.divf %31, %32 : vector<2x1x1xf32>
    %cst_20 = arith.constant 9.99999974E-6 : f32
    %34 = vector.broadcast %cst_20 : f32 to vector<2x1x1xf32>
    %35 = arith.addf %33, %34 : vector<2x1x1xf32>
    %36 = math.rsqrt %35 : vector<2x1x1xf32>
    %37 = vector.broadcast %36 : vector<2x1x1xf32> to vector<2x8x64xf32>
    %38 = arith.mulf %24, %37 : vector<2x8x64xf32>
    %39 = vector.shape_cast %13 : vector<8x64xf32> to vector<1x8x64xf32>
    %40 = vector.broadcast %39 : vector<1x8x64xf32> to vector<2x8x64xf32>
    %41 = arith.mulf %38, %40 : vector<2x8x64xf32>
    %42 = vector.shape_cast %14 : vector<8x64xf32> to vector<1x8x64xf32>
    %43 = vector.broadcast %42 : vector<1x8x64xf32> to vector<2x8x64xf32>
    %44 = arith.addf %41, %43 : vector<2x8x64xf32>
    %cst_21 = arith.constant 0.000000e+00 : f32
    %45 = vector.broadcast %cst_21 : f32 to vector<2x1x64xf32>
    %c0_22 = arith.constant 0 : index
    %c0_23 = arith.constant 0 : index
    %c0_24 = arith.constant 0 : index
    %46 = vector.load %arg13[%c0_22, %c0_23, %c0_24] : memref<2x10x64xf32, #tpu.memory_space<vmem>>, vector<2x1x64xf32>
    tpu.vector_store %arg13[%c0_22, %c0_23, %c0_24], %45 {strides = array<i32>} : memref<2x10x64xf32, #tpu.memory_space<vmem>>, vector<2x1x64xf32>,
    %cst_25 = arith.constant 0.000000e+00 : f32
    %47 = vector.broadcast %cst_25 : f32 to vector<2x1x64xf32>
    %c0_26 = arith.constant 0 : index
    %c9 = arith.constant 9 : index
    %c0_27 = arith.constant 0 : index
    %48 = vector.load %arg13[%c0_26, %c9, %c0_27] : memref<2x10x64xf32, #tpu.memory_space<vmem>>, vector<2x1x64xf32>
    tpu.vector_store %arg13[%c0_26, %c9, %c0_27], %47 {strides = array<i32>} : memref<2x10x64xf32, #tpu.memory_space<vmem>>, vector<2x1x64xf32>,
    %c0_28 = arith.constant 0 : index
    %c1 = arith.constant 1 : index
    %c0_29 = arith.constant 0 : index
    %49 = vector.load %arg13[%c0_28, %c1, %c0_29] : memref<2x10x64xf32, #tpu.memory_space<vmem>>, vector<2x8x64xf32>
    tpu.vector_store %arg13[%c0_28, %c1, %c0_29], %44 {strides = array<i32>} : memref<2x10x64xf32, #tpu.memory_space<vmem>>, vector<2x8x64xf32>,
    %c0_30 = arith.constant 0 : index
    %c0_31 = arith.constant 0 : index
    %c0_32 = arith.constant 0 : index
    %50 = tpu.strided_load %arg13[%c0_30, %c0_31, %c0_32] {strides = array<i32: 1, 2, 1>} : memref<2x10x64xf32, #tpu.memory_space<vmem>>, vector<2x4x64xf32>
    %c0_33 = arith.constant 0 : index
    %c1_34 = arith.constant 1 : index
    %c0_35 = arith.constant 0 : index
    %51 = tpu.strided_load %arg13[%c0_33, %c1_34, %c0_35] {strides = array<i32: 1, 2, 1>} : memref<2x10x64xf32, #tpu.memory_space<vmem>>, vector<2x4x64xf32>
    %c0_36 = arith.constant 0 : index
    %c2 = arith.constant 2 : index
    %c0_37 = arith.constant 0 : index
    %52 = tpu.strided_load %arg13[%c0_36, %c2, %c0_37] {strides = array<i32: 1, 2, 1>} : memref<2x10x64xf32, #tpu.memory_space<vmem>>, vector<2x4x64xf32>
    %c0_38 = arith.constant 0 : index
    %c3 = arith.constant 3 : index
    %c0_39 = arith.constant 0 : index
    %53 = tpu.strided_load %arg13[%c0_38, %c3, %c0_39] {strides = array<i32: 1, 2, 1>} : memref<2x10x64xf32, #tpu.memory_space<vmem>>, vector<2x4x64xf32>
    %54 = tpu.concatenate %50, %51, %52, %53 in 2 : vector<2x4x64xf32>, vector<2x4x64xf32>, vector<2x4x64xf32>, vector<2x4x64xf32> -> vector<2x4x256xf32>
    %55 = vector.shape_cast %54 : vector<2x4x256xf32> to vector<8x256xf32>
    %c0_40 = arith.constant 0 : index
    %c0_41 = arith.constant 0 : index
    %56 = vector.load %arg6[%c0_40, %c0_41] : memref<256x64xf32, #tpu.memory_space<vmem>>, vector<256x64xf32>
    %cst_42 = arith.constant dense<0.000000e+00> : vector<8x64xf32>
    %57 = tpu.matmul %55, %56, %cst_42 {dimension_numbers = #tpu.dot_dimension_numbers<[1], [0], [0], [1], [0, 0, 1, 1], [], []>} : vector<8x256xf32>, vector<256x64xf32>, vector<8x64xf32> -> vector<8x64xf32>
    %c0_43 = arith.constant 0 : index
    %c0_44 = arith.constant 0 : index
    %58 = vector.load %arg7[%c0_43, %c0_44] : memref<1x64xf32, #tpu.memory_space<vmem>>, vector<1x64xf32>
    %59 = vector.broadcast %58 : vector<1x64xf32> to vector<8x64xf32>
    %60 = arith.addf %57, %59 : vector<8x64xf32>
    %cst_45 = arith.constant 0.000000e+00 : f32
    %61 = vector.broadcast %cst_45 : f32 to vector<8x64xf32>
    %62 = arith.cmpf ogt, %60, %61 : vector<8x64xf32>
    %cst_46 = arith.constant 2.000000e-01 : f32
    %63 = vector.broadcast %cst_46 : f32 to vector<8x64xf32>
    %64 = arith.mulf %63, %60 : vector<8x64xf32>
    %65 = arith.select %62, %60, %64 : vector<8x64xi1>, vector<8x64xf32>
    %66 = vector.shape_cast %65 : vector<8x64xf32> to vector<2x4x64xf32>
    %c0_47 = arith.constant 0 : index
    %c0_48 = arith.constant 0 : index
    %67 = vector.load %arg8[%c0_47, %c0_48] : memref<4x64xf32, #tpu.memory_space<vmem>>, vector<4x64xf32>
    %c0_49 = arith.constant 0 : index
    %c0_50 = arith.constant 0 : index
    %68 = vector.load %arg9[%c0_49, %c0_50] : memref<4x64xf32, #tpu.memory_space<vmem>>, vector<4x64xf32>
    %cst_51 = arith.constant dense<0.000000e+00> : vector<2x4xf32>
    %69 = vector.multi_reduction <add>, %66, %cst_51 [2] : vector<2x4x64xf32> to vector<2x4xf32>
    %70 = vector.shape_cast %69 : vector<2x4xf32> to vector<2x4x1xf32>
    %cst_52 = arith.constant 6.400000e+01 : f32
    %71 = vector.broadcast %cst_52 : f32 to vector<2x4x1xf32>
    %72 = arith.divf %70, %71 : vector<2x4x1xf32>
    %cst_53 = arith.constant dense<0.000000e+00> : vector<2x1xf32>
    %73 = vector.multi_reduction <add>, %72, %cst_53 [1] : vector<2x4x1xf32> to vector<2x1xf32>
    %74 = vector.shape_cast %73 : vector<2x1xf32> to vector<2x1x1xf32>
    %cst_54 = arith.constant 4.000000e+00 : f32
    %75 = vector.broadcast %cst_54 : f32 to vector<2x1x1xf32>
    %76 = arith.divf %74, %75 : vector<2x1x1xf32>
    %77 = vector.broadcast %76 : vector<2x1x1xf32> to vector<2x4x64xf32>
    %78 = arith.subf %66, %77 : vector<2x4x64xf32>
    %79 = arith.mulf %78, %78 : vector<2x4x64xf32>
    %cst_55 = arith.constant dense<0.000000e+00> : vector<2x4xf32>
    %80 = vector.multi_reduction <add>, %79, %cst_55 [2] : vector<2x4x64xf32> to vector<2x4xf32>
    %81 = vector.shape_cast %80 : vector<2x4xf32> to vector<2x4x1xf32>
    %cst_56 = arith.constant 6.400000e+01 : f32
    %82 = vector.broadcast %cst_56 : f32 to vector<2x4x1xf32>
    %83 = arith.divf %81, %82 : vector<2x4x1xf32>
    %cst_57 = arith.constant dense<0.000000e+00> : vector<2x1xf32>
    %84 = vector.multi_reduction <add>, %83, %cst_57 [1] : vector<2x4x1xf32> to vector<2x1xf32>
    %85 = vector.shape_cast %84 : vector<2x1xf32> to vector<2x1x1xf32>
    %cst_58 = arith.constant 4.000000e+00 : f32
    %86 = vector.broadcast %cst_58 : f32 to vector<2x1x1xf32>
    %87 = arith.divf %85, %86 : vector<2x1x1xf32>
    %cst_59 = arith.constant 9.99999974E-6 : f32
    %88 = vector.broadcast %cst_59 : f32 to vector<2x1x1xf32>
    %89 = arith.addf %87, %88 : vector<2x1x1xf32>
    %90 = math.rsqrt %89 : vector<2x1x1xf32>
    %91 = vector.broadcast %90 : vector<2x1x1xf32> to vector<2x4x64xf32>
    %92 = arith.mulf %78, %91 : vector<2x4x64xf32>
    %93 = vector.shape_cast %67 : vector<4x64xf32> to vector<1x4x64xf32>
    %94 = vector.broadcast %93 : vector<1x4x64xf32> to vector<2x4x64xf32>
    %95 = arith.mulf %92, %94 : vector<2x4x64xf32>
    %96 = vector.shape_cast %68 : vector<4x64xf32> to vector<1x4x64xf32>
    %97 = vector.broadcast %96 : vector<1x4x64xf32> to vector<2x4x64xf32>
    %98 = arith.addf %95, %97 : vector<2x4x64xf32>
    %c0_60 = arith.constant 0 : index
    %c0_61 = arith.constant 0 : index
    %99 = vector.load %arg10[%c0_60, %c0_61] : memref<4x64xf32, #tpu.memory_space<vmem>>, vector<4x64xf32>
    %100 = vector.shape_cast %99 : vector<4x64xf32> to vector<1x4x64xf32>
    %101 = vector.broadcast %100 : vector<1x4x64xf32> to vector<2x4x64xf32>
    %102 = arith.mulf %98, %101 : vector<2x4x64xf32>
    %cst_62 = arith.constant dense<0.000000e+00> : vector<2x4xf32>
    %103 = vector.multi_reduction <add>, %102, %cst_62 [2] : vector<2x4x64xf32> to vector<2x4xf32>
    %cst_63 = arith.constant dense<0.000000e+00> : vector<2xf32>
    %104 = vector.multi_reduction <add>, %103, %cst_63 [1] : vector<2x4xf32> to vector<2xf32>
    %105 = vector.shape_cast %104 : vector<2xf32> to vector<1x2xf32>
    %c0_64 = arith.constant 0 : index
    %c0_65 = arith.constant 0 : index
    %106 = vector.load %arg11[%c0_64, %c0_65] : memref<1x2xf32, #tpu.memory_space<vmem>>, vector<1x2xf32>
    %107 = arith.addf %105, %106 : vector<1x2xf32>
    %c0_66 = arith.constant 0 : index
    %c0_67 = arith.constant 0 : index
    %c0_68 = arith.constant 0 : index
    %108 = vector.load %arg12[%c0_66, %c0_67, %c0_68] : memref<1x1x2xf32, #tpu.memory_space<vmem>>, vector<1x1x2xf32>
    %109 = vector.shape_cast %108 : vector<1x1x2xf32> to vector<1x2xf32>
    %110 = vector.shape_cast %107 : vector<1x2xf32> to vector<1x1x2xf32>
    tpu.vector_store %arg12[%c0_66, %c0_67, %c0_68], %110 {strides = array<i32>} : memref<1x1x2xf32, #tpu.memory_space<vmem>>, vector<1x1x2xf32>,
    return
  }
  func.func @transform_0(%arg0: i32) -> (i32, i32, i32) {
    %c0_i32 = arith.constant 0 : i32
    %c0_i32_0 = arith.constant 0 : i32
    %c0_i32_1 = arith.constant 0 : i32
    return %arg0, %c0_i32, %c0_i32_0 : i32, i32, i32
  }
  func.func @transform_1(%arg0: i32) -> (i32, i32) {
    %c0_i32 = arith.constant 0 : i32
    %c0_i32_0 = arith.constant 0 : i32
    %c0_i32_1 = arith.constant 0 : i32
    return %c0_i32, %c0_i32_0 : i32, i32
  }
  func.func @transform_2(%arg0: i32) -> (i32, i32) {
    %c0_i32 = arith.constant 0 : i32
    %c0_i32_0 = arith.constant 0 : i32
    %c0_i32_1 = arith.constant 0 : i32
    return %c0_i32, %c0_i32_0 : i32, i32
  }
  func.func @transform_3(%arg0: i32) -> (i32, i32) {
    %c0_i32 = arith.constant 0 : i32
    %c0_i32_0 = arith.constant 0 : i32
    %c0_i32_1 = arith.constant 0 : i32
    return %c0_i32, %c0_i32_0 : i32, i32
  }
  func.func @transform_4(%arg0: i32) -> (i32, i32) {
    %c0_i32 = arith.constant 0 : i32
    %c0_i32_0 = arith.constant 0 : i32
    %c0_i32_1 = arith.constant 0 : i32
    return %c0_i32, %c0_i32_0 : i32, i32
  }
  func.func @transform_5(%arg0: i32) -> (i32, i32) {
    %c0_i32 = arith.constant 0 : i32
    %c0_i32_0 = arith.constant 0 : i32
    %c0_i32_1 = arith.constant 0 : i32
    return %c0_i32, %c0_i32_0 : i32, i32
  }
  func.func @transform_6(%arg0: i32) -> (i32, i32) {
    %c0_i32 = arith.constant 0 : i32
    %c0_i32_0 = arith.constant 0 : i32
    %c0_i32_1 = arith.constant 0 : i32
    return %c0_i32, %c0_i32_0 : i32, i32
  }
  func.func @transform_7(%arg0: i32) -> (i32, i32) {
    %c0_i32 = arith.constant 0 : i32
    %c0_i32_0 = arith.constant 0 : i32
    %c0_i32_1 = arith.constant 0 : i32
    return %c0_i32, %c0_i32_0 : i32, i32
  }
  func.func @transform_8(%arg0: i32) -> (i32, i32) {
    %c0_i32 = arith.constant 0 : i32
    %c0_i32_0 = arith.constant 0 : i32
    %c0_i32_1 = arith.constant 0 : i32
    return %c0_i32, %c0_i32_0 : i32, i32
  }
  func.func @transform_9(%arg0: i32) -> (i32, i32) {
    %c0_i32 = arith.constant 0 : i32
    %c0_i32_0 = arith.constant 0 : i32
    %c0_i32_1 = arith.constant 0 : i32
    return %c0_i32, %c0_i32_0 : i32, i32
  }
  func.func @transform_10(%arg0: i32) -> (i32, i32) {
    %c0_i32 = arith.constant 0 : i32
    %c0_i32_0 = arith.constant 0 : i32
    %c0_i32_1 = arith.constant 0 : i32
    return %c0_i32, %c0_i32_0 : i32, i32
  }
  func.func @transform_11(%arg0: i32) -> (i32, i32, i32) {
    %c0_i32 = arith.constant 0 : i32
    %c0_i32_0 = arith.constant 0 : i32
    %c0_i32_1 = arith.constant 0 : i32
    return %arg0, %c0_i32, %c0_i32_0 : i32, i32, i32
  }
}

</mosaic_0001>

<llo_original>
// kernel: tpu_custom_call.1
$region0: #{tpu_custom_call.1}
  #allocation0 [shape = 'u32[]', space=smem, size = 0x4, offset = 0x4, fixed_abs, tag = 'smem constant byte address 0x4 - core index']
  #allocation1 [shape = 'u32[144,128]{1,0:T(1,128)}', space=vmem, size = 0x12000, scoped, tag = 'internal scratch']
  #allocation2 [shape = 'f32[2,10,64]{2,1,0:T(8,128)}', space=vmem, size = 0x4000, scoped, tag = 'scratch operand']
  %s0 = inlined_call_operand.vmem [shape: f32[2,8,16], index: 0, kind: input, shape index: {}]
  %s1 = inlined_call_operand.vmem [shape: f32[16,64], index: 1, kind: input, shape index: {}]
  %s2 = inlined_call_operand.vmem [shape: f32[1,64], index: 2, kind: input, shape index: {}]
  %s3 = inlined_call_operand.vmem [shape: f32[8,64], index: 3, kind: input, shape index: {}]
  %s4 = inlined_call_operand.vmem [shape: f32[8,64], index: 4, kind: input, shape index: {}]
  %s5 = inlined_call_operand.vmem [shape: f32[256,64], index: 5, kind: input, shape index: {}]
  %s6 = inlined_call_operand.vmem [shape: f32[1,64], index: 6, kind: input, shape index: {}]
  %s7 = inlined_call_operand.vmem [shape: f32[4,64], index: 7, kind: input, shape index: {}]
  %s8 = inlined_call_operand.vmem [shape: f32[4,64], index: 8, kind: input, shape index: {}]
  %s9 = inlined_call_operand.vmem [shape: f32[4,64], index: 9, kind: input, shape index: {}]
  %s10 = inlined_call_operand.vmem [shape: f32[1,2], index: 10, kind: input, shape index: {}]
  %s11 = inlined_call_operand.hbm [shape: f32[1,1,2], index: 11, kind: output, shape index: {}]
  %s12 = sld [smem:[#allocation0]]
  $region54: #{tpu_custom_call.1} parent=0
    _
  %s14 = ssub.s32 1, %s12
  %s15 = scalar_select 0, %s14, %s12
  $region1: #{tpu_custom_call.1} parent=0
    #allocation3 [shape = 'u8[512]{0}', space=vmem, size = 0x400, scoped, tag = 'output window, operand 0, single buffered']
    #allocation4 [shape = 's32[1]{0}', space=sflag, size = 0x4, scoped, tag = 'scoped memory for tpu_custom_call.1']
    %16 = vsyncpa [#allocation4], 0
    // Predicated region
    $region2: #{tpu_custom_call.1} parent=1 // pred_check
      _
    $region3: #{tpu_custom_call.1} parent=1 // pred_check_branch
      %18 = sbr.rel (0) target = $region5
    $region4: #{tpu_custom_call.1} parent=1 // pred_region
      _
    $region5: #{tpu_custom_call.1} parent=1 // pred_fallthru
      _
    // Predicated region
    $region6: #{tpu_custom_call.1} parent=1 // pred_check
      _
    $region7: #{tpu_custom_call.1} parent=1 // pred_check_branch
      %20 = sbr.rel (0) target = $region9
    $region8: #{tpu_custom_call.1} parent=1 // pred_region
      _
    $region9: #{tpu_custom_call.1} parent=1 // pred_fallthru
      _
    // Predicated region
    $region10: #{tpu_custom_call.1} parent=1 // pred_check
      _
    $region11: #{tpu_custom_call.1} parent=1 // pred_check_branch
      %22 = sbr.rel (0) target = $region13
    $region12: #{tpu_custom_call.1} parent=1 // pred_region
      _
    $region13: #{tpu_custom_call.1} parent=1 // pred_fallthru
      _
    // Predicated region
    $region14: #{tpu_custom_call.1} parent=1 // pred_check
      _
    $region15: #{tpu_custom_call.1} parent=1 // pred_check_branch
      %24 = sbr.rel (0) target = $region17
    $region16: #{tpu_custom_call.1} parent=1 // pred_region
      _
    $region17: #{tpu_custom_call.1} parent=1 // pred_fallthru
      _
    // Predicated region
    $region18: #{tpu_custom_call.1} parent=1 // pred_check
      _
    $region19: #{tpu_custom_call.1} parent=1 // pred_check_branch
      %26 = sbr.rel (0) target = $region21
    $region20: #{tpu_custom_call.1} parent=1 // pred_region
      _
    $region21: #{tpu_custom_call.1} parent=1 // pred_fallthru
      _
    // Predicated region
    $region22: #{tpu_custom_call.1} parent=1 // pred_check
      _
    $region23: #{tpu_custom_call.1} parent=1 // pred_check_branch
      %28 = sbr.rel (0) target = $region25
    $region24: #{tpu_custom_call.1} parent=1 // pred_region
      _
    $region25: #{tpu_custom_call.1} parent=1 // pred_fallthru
      _
    // Predicated region
    $region26: #{tpu_custom_call.1} parent=1 // pred_check
      _
    $region27: #{tpu_custom_call.1} parent=1 // pred_check_branch
      %30 = sbr.rel (0) target = $region29
    $region28: #{tpu_custom_call.1} parent=1 // pred_region
      _
    $region29: #{tpu_custom_call.1} parent=1 // pred_fallthru
      _
    // Predicated region
    $region30: #{tpu_custom_call.1} parent=1 // pred_check
      _
    $region31: #{tpu_custom_call.1} parent=1 // pred_check_branch
      %32 = sbr.rel (0) target = $region33
    $region32: #{tpu_custom_call.1} parent=1 // pred_region
      _
    $region33: #{tpu_custom_call.1} parent=1 // pred_fallthru
      _
    // Predicated region
    $region34: #{tpu_custom_call.1} parent=1 // pred_check
      _
    $region35: #{tpu_custom_call.1} parent=1 // pred_check_branch
      %34 = sbr.rel (0) target = $region37
    $region36: #{tpu_custom_call.1} parent=1 // pred_region
      _
    $region37: #{tpu_custom_call.1} parent=1 // pred_fallthru
      _
    // Predicated region
    $region38: #{tpu_custom_call.1} parent=1 // pred_check
      _
    $region39: #{tpu_custom_call.1} parent=1 // pred_check_branch
      %36 = sbr.rel (0) target = $region41
    $region40: #{tpu_custom_call.1} parent=1 // pred_region
      _
    $region41: #{tpu_custom_call.1} parent=1 // pred_fallthru
      _
    // Predicated region
    $region42: #{tpu_custom_call.1} parent=1 // pred_check
      _
    $region43: #{tpu_custom_call.1} parent=1 // pred_check_branch
      %38 = sbr.rel (0) target = $region45
    $region44: #{tpu_custom_call.1} parent=1 // pred_region
      _
    $region45: #{tpu_custom_call.1} parent=1 // pred_fallthru
      _
    %v39 = vld [vmem:[%s0] sm:$0xff]
    %v40 = vld [vmem:[%s0 + $0x8] sm:$0xff]
    %v41 = vld [vmem:[%s1] sm:$0xff]
    %v42 = vld [vmem:[%s1 + $0x8] sm:$0xff]
    %v43 = vld [vmem:[%s2] sm:$0x1]
    %v45 = vlaneseq
    %v46 = vshrl.u32 %v45, 7
    %v47 = vsub.s32 0, %v46
    %v48 = vrot.slane %v43, %v47
    %vm50 = vcmask 130048
    %v52 = vsel %vm50, %v39, 0
    %v55 = vsel %vm50, %v40, 0
    %57 = vmatprep.subr.mxu0 0.0
    %58 = vmatpush1.msra.mxu0 %v41
    %59 = vmatprep.subr.mxu0 0.0
    %60 = vmatpush1.msra.mxu0 %v42
    %61 = vmatprep.subr.mxu0 0.0
    %62 = vmatpush1.msra.mxu0 0.0
    %63 = vmatprep.subr.mxu0 0.0
    %64 = vmatpush1.msra.mxu0 0.0
    %65 = vmatprep.subr.mxu0 0.0
    %66 = vmatpush1.msra.mxu0 0.0
    %67 = vmatprep.subr.mxu0 0.0
    %68 = vmatpush1.msra.mxu0 0.0
    %69 = vmatprep.subr.mxu0 0.0
    %70 = vmatpush1.msra.mxu0 0.0
    %71 = vmatprep.subr.mxu0 0.0
    %72 = vmatpush1.msra.mxu0 0.0
    %73 = vmatprep.subr.mxu0 0.0
    %74 = vmatpush1.msra.mxu0 0.0
    %75 = vmatprep.subr.mxu0 0.0
    %76 = vmatpush1.msra.mxu0 0.0
    %77 = vmatprep.subr.mxu0 0.0
    %78 = vmatpush1.msra.mxu0 0.0
    %79 = vmatprep.subr.mxu0 0.0
    %80 = vmatpush1.msra.mxu0 0.0
    %81 = vmatprep.subr.mxu0 0.0
    %82 = vmatpush1.msra.mxu0 0.0
    %83 = vmatprep.subr.mxu0 0.0
    %84 = vmatpush1.msra.mxu0 0.0
    %85 = vmatprep.subr.mxu0 0.0
    %86 = vmatpush1.msra.mxu0 0.0
    %87 = vmatprep.subr.mxu0 0.0
    %88 = vmatpush1.msra.mxu0 0.0
    %89 = vmatprep.subr.mxu0 0.0
    %90 = vmatpush1.msra.mxu0 0.0
    %91 = vmatprep.subr.mxu0 0.0
    %92 = vmatpush1.msra.mxu0 0.0
    %93 = vmatprep.subr.mxu0 0.0
    %94 = vmatpush1.msra.mxu0 0.0
    %95 = vmatprep.subr.mxu0 0.0
    %96 = vmatpush1.msra.mxu0 0.0
    %97 = vmatprep.subr.mxu0 0.0
    %98 = vmatpush1.msra.mxu0 0.0
    %99 = vmatprep.subr.mxu0 0.0
    %100 = vmatpush1.msra.mxu0 0.0
    %101 = vmatprep.subr.mxu0 0.0
    %102 = vmatpush1.msra.mxu0 0.0
    %103 = vmatprep.subr.mxu0 0.0
    %104 = vmatpush1.msra.mxu0 0.0
    %105 = vmatprep.subr.mxu0 0.0
    %106 = vmatpush1.msra.mxu0 0.0
    %107 = vmatprep.subr.mxu0 0.0
    %108 = vmatpush1.msra.mxu0 0.0
    %109 = vmatprep.subr.mxu0 0.0
    %110 = vmatpush1.msra.mxu0 0.0
    %111 = vmatprep.subr.mxu0 0.0
    %112 = vmatpush1.msra.mxu0 0.0
    %113 = vmatprep.subr.mxu0 0.0
    %114 = vmatpush1.msra.mxu0 0.0
    %115 = vmatprep.subr.mxu0 0.0
    %116 = vmatpush1.msra.mxu0 0.0
    %117 = vmatprep.subr.mxu0 0.0
    %118 = vmatpush1.msra.mxu0 0.0
    %119 = vmatprep.subr.mxu0 0.0
    %120 = vmatpush1.msra.mxu0 0.0
    %121 = vmatprep.mubr.f32.mxu0 0.0
    %122 = vmatmul.mubr.f32.gmra.mrb[0].mxu0 %v52
    %v123 = vpop.f32.mrb[0].mxu0
    %v124 = vadd.f32 %v48, %v123
    %v125 = vpop.f32.mrb[0].mxu0
    %126 = vmatprep.mubr.f32.mxu0 0.0
    %127 = vmatmul.mubr.f32.gmra.mrb[0].mxu0 %v55
    %v128 = vpop.f32.mrb[0].mxu0
    %v129 = vadd.f32 %v48, %v128
    %v130 = vpop.f32.mrb[0].mxu0
    %131 = vdwg.mxu0
    %vm132 = vcmp.gt.f32.partialorder %v124, 0.0
    %vm133 = vcmp.gt.f32.partialorder %v129, 0.0
    %v134 = vmul.f32 %v124, 0.2
    %v135 = vmul.f32 %v129, 0.2
    %v136 = vsel %vm132, %v124, %v134
    %v137 = vsel %vm133, %v129, %v135
    %v138 = vld [vmem:[%s3] sm:$0xff]
    %v139 = vld [vmem:[%s4] sm:$0xff]
    %vm140 = vcmask 523264
    %v141 = vsel %vm140, %v136, 0.0
    %142 = vadd.xlane.f32.xlu0 %v141
    %v143 = vpop.xlane.xlu0 %142
    %v144 = vsel %vm140, %v137, 0.0
    %145 = vadd.xlane.f32.xlu0 %v144
    %v146 = vpop.xlane.xlu0 %145
    %v147 = vrcp.pop 64.0
    %v148 = vmul.f32 %v143, %v147
    %v149 = vmul.f32 %v146, %v147
    %v150 = vrot.slane %v148, 4
    %v151 = vadd.f32 %v148, %v150
    %v152 = vrot.slane %v151, 2
    %v153 = vadd.f32 %v151, %v152
    %v154 = vrot.slane %v153, 1
    %v155 = vadd.f32 %v153, %v154
    %v156 = vrot.slane %v149, 4
    %v157 = vadd.f32 %v149, %v156
    %v158 = vrot.slane %v157, 2
    %v159 = vadd.f32 %v157, %v158
    %v160 = vrot.slane %v159, 1
    %v161 = vadd.f32 %v159, %v160
    %v162 = vrcp.pop 8.0
    %v163 = vmul.f32 %v155, %v162
    %v164 = vmul.f32 %v161, %v162
    %v165 = vsub.f32 %v136, %v163
    %v166 = vsub.f32 %v137, %v164
    %v167 = vmul.f32 %v165, %v165
    %v168 = vmul.f32 %v166, %v166
    %v169 = vsel %vm140, %v167, 0.0
    %170 = vadd.xlane.f32.xlu0 %v169
    %v171 = vpop.xlane.xlu0 %170
    %v172 = vsel %vm140, %v168, 0.0
    %173 = vadd.xlane.f32.xlu0 %v172
    %v174 = vpop.xlane.xlu0 %173
    %v175 = vmul.f32 %v171, %v147
    %v176 = vmul.f32 %v174, %v147
    %v177 = vrot.slane %v175, 4
    %v178 = vadd.f32 %v175, %v177
    %v179 = vrot.slane %v178, 2
    %v180 = vadd.f32 %v178, %v179
    %v181 = vrot.slane %v180, 1
    %v182 = vadd.f32 %v180, %v181
    %v183 = vrot.slane %v176, 4
    %v184 = vadd.f32 %v176, %v183
    %v185 = vrot.slane %v184, 2
    %v186 = vadd.f32 %v184, %v185
    %v187 = vrot.slane %v186, 1
    %v188 = vadd.f32 %v186, %v187
    %v189 = vmul.f32 %v182, %v162
    %v190 = vmul.f32 %v188, %v162
    %v191 = vadd.f32 %v189, 1e-05
    %v192 = vadd.f32 %v190, 1e-05
    %v193 = vrsqrt.pop %v191
    %v194 = vrsqrt.pop %v192
    %v195 = vmul.f32 %v165, %v193
    %v196 = vmul.f32 %v166, %v194
    %v197 = vmul.f32 %v195, %v138
    %v198 = vmul.f32 %v196, %v138
    %v199 = vadd.f32 %v197, %v139
    %v200 = vadd.f32 %v198, %v139
    %vm201 = vcmask 516096
    %202 = vst.msk [vmem:[#allocation2] sm:$0x1] %vm201, 0.0
    %203 = vst.msk [vmem:[#allocation2 + $0x10] sm:$0x1] %vm201, 0.0
    %204 = vst.msk [vmem:[#allocation2 + $0x9] sm:$0x1] %vm201, 0.0
    %205 = vst.msk [vmem:[#allocation2 + $0x19] sm:$0x1] %vm201, 0.0
    %206 = vst.msk [vmem:[#allocation2 + $0x1] sm:$0xff] %vm140, %v199
    %207 = vst.msk [vmem:[#allocation2 + $0x11] sm:$0xff] %vm140, %v200
    %v208 = vld [vmem:[#allocation2] ss:$2 sm:$0xf]
    %s209 = scalar_lea.vmem [#allocation2], 16
    %v210 = vld [vmem:[%s209] ss:$2 sm:$0xf]
    %s211 = scalar_lea.vmem [#allocation2], 1
    %v212 = vld [vmem:[%s211] ss:$2 sm:$0xf]
    %s213 = scalar_lea.vmem [#allocation2], 17
    %v214 = vld [vmem:[%s213] ss:$2 sm:$0xf]
    %s215 = scalar_lea.vmem [#allocation2], 2
    %v216 = vld [vmem:[%s215] ss:$2 sm:$0xf]
    %s217 = scalar_lea.vmem [#allocation2], 18
    %v218 = vld [vmem:[%s217] ss:$2 sm:$0xf]
    %s219 = scalar_lea.vmem [#allocation2], 3
    %v220 = vld [vmem:[%s219] ss:$2 sm:$0xf]
    %s221 = scalar_lea.vmem [#allocation2], 19
    %v222 = vld [vmem:[%s221] ss:$2 sm:$0xf]
    %225 = vrot.lane.b32.xlu0 %v212, 64
    %v226 = vpop.permute.xlu0 %225
    %227 = vrot.lane.b32.xlu0 %v214, 64
    %v228 = vpop.permute.xlu0 %227
    %233 = vrot.lane.b32.xlu0 %v220, 64
    %v234 = vpop.permute.xlu0 %233
    %235 = vrot.lane.b32.xlu0 %v222, 64
    %v236 = vpop.permute.xlu0 %235
    %v239 = vsel %vm140, %v208, %v226
    %v240 = vsel %vm140, %v210, %v228
    %v241 = vsel %vm140, %v216, %v234
    %v242 = vsel %vm140, %v218, %v236
    %v247 = vcombine.low %v239, %v241
    %v248 = vcombine.low %v240, %v242
    %v249 = vld [vmem:[%s5] sm:$0xff]
    %v250 = vld [vmem:[%s5 + $0x8] sm:$0xff]
    %v251 = vld [vmem:[%s5 + $0x10] sm:$0xff]
    %v252 = vld [vmem:[%s5 + $0x18] sm:$0xff]
    %v253 = vld [vmem:[%s5 + $0x20] sm:$0xff]
    %v254 = vld [vmem:[%s5 + $0x28] sm:$0xff]
    %v255 = vld [vmem:[%s5 + $0x30] sm:$0xff]
    %v256 = vld [vmem:[%s5 + $0x38] sm:$0xff]
    %v257 = vld [vmem:[%s5 + $0x40] sm:$0xff]
    %v258 = vld [vmem:[%s5 + $0x48] sm:$0xff]
    %v259 = vld [vmem:[%s5 + $0x50] sm:$0xff]
    %v260 = vld [vmem:[%s5 + $0x58] sm:$0xff]
    %v261 = vld [vmem:[%s5 + $0x60] sm:$0xff]
    %v262 = vld [vmem:[%s5 + $0x68] sm:$0xff]
    %v263 = vld [vmem:[%s5 + $0x70] sm:$0xff]
    %v264 = vld [vmem:[%s5 + $0x78] sm:$0xff]
    %v265 = vld [vmem:[%s5 + $0x80] sm:$0xff]
    %v266 = vld [vmem:[%s5 + $0x88] sm:$0xff]
    %v267 = vld [vmem:[%s5 + $0x90] sm:$0xff]
    %v268 = vld [vmem:[%s5 + $0x98] sm:$0xff]
    %v269 = vld [vmem:[%s5 + $0xa0] sm:$0xff]
    %v270 = vld [vmem:[%s5 + $0xa8] sm:$0xff]
    %v271 = vld [vmem:[%s5 + $0xb0] sm:$0xff]
    %v272 = vld [vmem:[%s5 + $0xb8] sm:$0xff]
    %v273 = vld [vmem:[%s5 + $0xc0] sm:$0xff]
    %v274 = vld [vmem:[%s5 + $0xc8] sm:$0xff]
    %v275 = vld [vmem:[%s5 + $0xd0] sm:$0xff]
    %v276 = vld [vmem:[%s5 + $0xd8] sm:$0xff]
    %v277 = vld [vmem:[%s5 + $0xe0] sm:$0xff]
    %v278 = vld [vmem:[%s5 + $0xe8] sm:$0xff]
    %v279 = vld [vmem:[%s5 + $0xf0] sm:$0xff]
    %v280 = vld [vmem:[%s5 + $0xf8] sm:$0xff]
    %v281 = vld [vmem:[%s6] sm:$0x1]
    %v283 = vlaneseq
    %v284 = vshrl.u32 %v283, 7
    %v285 = vsub.s32 0, %v284
    %v286 = vrot.slane %v281, %v285
    %v288 = vcombine.low %v247, %v248
    %v289 = vcombine.high %v247, %v248
    %292 = vmatprep.subr.mxu0 0.0
    %293 = vmatpush1.msra.mxu0 %v249
    %294 = vmatprep.subr.mxu0 0.0
    %295 = vmatpush1.msra.mxu0 %v250
    %296 = vmatprep.subr.mxu0 0.0
    %297 = vmatpush1.msra.mxu0 %v251
    %298 = vmatprep.subr.mxu0 0.0
    %299 = vmatpush1.msra.mxu0 %v252
    %300 = vmatprep.subr.mxu0 0.0
    %301 = vmatpush1.msra.mxu0 %v253
    %302 = vmatprep.subr.mxu0 0.0
    %303 = vmatpush1.msra.mxu0 %v254
    %304 = vmatprep.subr.mxu0 0.0
    %305 = vmatpush1.msra.mxu0 %v255
    %306 = vmatprep.subr.mxu0 0.0
    %307 = vmatpush1.msra.mxu0 %v256
    %308 = vmatprep.subr.mxu0 0.0
    %309 = vmatpush1.msra.mxu0 %v257
    %310 = vmatprep.subr.mxu0 0.0
    %311 = vmatpush1.msra.mxu0 %v258
    %312 = vmatprep.subr.mxu0 0.0
    %313 = vmatpush1.msra.mxu0 %v259
    %314 = vmatprep.subr.mxu0 0.0
    %315 = vmatpush1.msra.mxu0 %v260
    %316 = vmatprep.subr.mxu0 0.0
    %317 = vmatpush1.msra.mxu0 %v261
    %318 = vmatprep.subr.mxu0 0.0
    %319 = vmatpush1.msra.mxu0 %v262
    %320 = vmatprep.subr.mxu0 0.0
    %321 = vmatpush1.msra.mxu0 %v263
    %322 = vmatprep.subr.mxu0 0.0
    %323 = vmatpush1.msra.mxu0 %v264
    %324 = vmatprep.subr.mxu0 0.0
    %325 = vmatpush1.msra.mxu0 %v265
    %326 = vmatprep.subr.mxu0 0.0
    %327 = vmatpush1.msra.mxu0 %v266
    %328 = vmatprep.subr.mxu0 0.0
    %329 = vmatpush1.msra.mxu0 %v267
    %330 = vmatprep.subr.mxu0 0.0
    %331 = vmatpush1.msra.mxu0 %v268
    %332 = vmatprep.subr.mxu0 0.0
    %333 = vmatpush1.msra.mxu0 %v269
    %334 = vmatprep.subr.mxu0 0.0
    %335 = vmatpush1.msra.mxu0 %v270
    %336 = vmatprep.subr.mxu0 0.0
    %337 = vmatpush1.msra.mxu0 %v271
    %338 = vmatprep.subr.mxu0 0.0
    %339 = vmatpush1.msra.mxu0 %v272
    %340 = vmatprep.subr.mxu0 0.0
    %341 = vmatpush1.msra.mxu0 %v273
    %342 = vmatprep.subr.mxu0 0.0
    %343 = vmatpush1.msra.mxu0 %v274
    %344 = vmatprep.subr.mxu0 0.0
    %345 = vmatpush1.msra.mxu0 %v275
    %346 = vmatprep.subr.mxu0 0.0
    %347 = vmatpush1.msra.mxu0 %v276
    %348 = vmatprep.subr.mxu0 0.0
    %349 = vmatpush1.msra.mxu0 %v277
    %350 = vmatprep.subr.mxu0 0.0
    %351 = vmatpush1.msra.mxu0 %v278
    %352 = vmatprep.subr.mxu0 0.0
    %353 = vmatpush1.msra.mxu0 %v279
    %354 = vmatprep.subr.mxu0 0.0
    %355 = vmatpush1.msra.mxu0 %v280
    %356 = vmatprep.mubr.f32.mxu0 %v289
    %357 = vmatmul.mubr.f32.gmra.mrb[0].mxu0 %v288
    %v358 = vpop.f32.mrb[0].mxu0
    %v359 = vadd.f32 %v286, %v358
    %v360 = vpop.f32.mrb[0].mxu0
    %361 = vdwg.mxu0
    %vm362 = vcmp.gt.f32.partialorder %v359, 0.0
    %v363 = vmul.f32 %v359, 0.2
    %v364 = vsel %vm362, %v359, %v363
    %v366 = vcombine.high %v364, %v364
    %v368 = vld [vmem:[%s7] sm:$0xf]
    %v369 = vld [vmem:[%s8] sm:$0xf]
    %vm370 = vcmask 519168
    %v371 = vsel %vm370, %v364, 0.0
    %372 = vadd.xlane.f32.xlu0 %v371
    %v373 = vpop.xlane.xlu0 %372
    %v374 = vsel %vm370, %v366, 0.0
    %375 = vadd.xlane.f32.xlu0 %v374
    %v376 = vpop.xlane.xlu0 %375
    %v377 = vmul.f32 %v373, %v147
    %v378 = vmul.f32 %v376, %v147
    %vm379 = vcmask 1043456
    %v380 = vsel %vm379, %v377, 0.0
    %v381 = vrot.slane %v380, 4
    %v382 = vadd.f32 %v380, %v381
    %v383 = vrot.slane %v382, 2
    %v384 = vadd.f32 %v382, %v383
    %v385 = vrot.slane %v384, 1
    %v386 = vadd.f32 %v384, %v385
    %v387 = vsel %vm379, %v378, 0.0
    %v388 = vrot.slane %v387, 4
    %v389 = vadd.f32 %v387, %v388
    %v390 = vrot.slane %v389, 2
    %v391 = vadd.f32 %v389, %v390
    %v392 = vrot.slane %v391, 1
    %v393 = vadd.f32 %v391, %v392
    %v394 = vrcp.pop 4.0
    %v395 = vmul.f32 %v386, %v394
    %v396 = vmul.f32 %v393, %v394
    %v397 = vsub.f32 %v364, %v395
    %v398 = vsub.f32 %v366, %v396
    %v399 = vmul.f32 %v397, %v397
    %v400 = vmul.f32 %v398, %v398
    %v401 = vsel %vm370, %v399, 0.0
    %402 = vadd.xlane.f32.xlu0 %v401
    %v403 = vpop.xlane.xlu0 %402
    %v404 = vsel %vm370, %v400, 0.0
    %405 = vadd.xlane.f32.xlu0 %v404
    %v406 = vpop.xlane.xlu0 %405
    %v407 = vmul.f32 %v403, %v147
    %v408 = vmul.f32 %v406, %v147
    %v409 = vsel %vm379, %v407, 0.0
    %v410 = vrot.slane %v409, 4
    %v411 = vadd.f32 %v409, %v410
    %v412 = vrot.slane %v411, 2
    %v413 = vadd.f32 %v411, %v412
    %v414 = vrot.slane %v413, 1
    %v415 = vadd.f32 %v413, %v414
    %v416 = vsel %vm379, %v408, 0.0
    %v417 = vrot.slane %v416, 4
    %v418 = vadd.f32 %v416, %v417
    %v419 = vrot.slane %v418, 2
    %v420 = vadd.f32 %v418, %v419
    %v421 = vrot.slane %v420, 1
    %v422 = vadd.f32 %v420, %v421
    %v423 = vmul.f32 %v415, %v394
    %v424 = vmul.f32 %v422, %v394
    %v425 = vadd.f32 %v423, 1e-05
    %v426 = vadd.f32 %v424, 1e-05
    %v427 = vrsqrt.pop %v425
    %v428 = vrsqrt.pop %v426
    %v429 = vmul.f32 %v397, %v427
    %v430 = vmul.f32 %v398, %v428
    %v431 = vmul.f32 %v429, %v368
    %v432 = vmul.f32 %v430, %v368
    %v433 = vadd.f32 %v431, %v369
    %v434 = vadd.f32 %v432, %v369
    %v435 = vld [vmem:[%s9] sm:$0xf]
    %v436 = vmul.f32 %v433, %v435
    %v437 = vmul.f32 %v434, %v435
    %v438 = vsel %vm370, %v436, 0.0
    %439 = vadd.xlane.f32.xlu0 %v438
    %v440 = vpop.xlane.xlu0 %439
    %v441 = vsel %vm370, %v437, 0.0
    %442 = vadd.xlane.f32.xlu0 %v441
    %v443 = vpop.xlane.xlu0 %442
    %v446 = vlaneseq
    %v447 = vand.u32 %v446, 127
    %v448 = vlaneseq
    %v449 = vshrl.u32 %v448, 7
    %v450 = vsub.s32 %v447, %v449
    %v451 = vrot.slane %v440, %v450
    %v452 = vlaneseq
    %v453 = vshrl.u32 %v452, 7
    %v454 = vsub.s32 %v447, %v453
    %v455 = vrot.slane %v443, %v454
    %vm456 = vcmask 1041409
    %v457 = vsel %vm456, %v455, %v451
    %vm459 = vcmask 25600
    %v460 = vsel %vm459, %v457, 0.0
    %461 = vadd.xlane.f32.xlu0 %v460
    %v462 = vpop.xlane.xlu0 %461
    %v463 = vld [vmem:[%s10] sm:$0x1]
    %v465 = vlaneseq
    %v466 = vshrl.u32 %v465, 7
    %v467 = vsub.s32 0, %v466
    %v468 = vrot.slane %v463, %v467
    %470 = vbcast.lane.b32.xlu0 %v468, 256
    %v471 = vpop.permute.xlu0 %470
    %v473 = vadd.f32 %v462, %v471
    %475 = vset.pattern.permute.xlu0 0
    %476 = vperm.xlu0 %475, %v473
    %v477 = vpop.permute.xlu0 %476
    %v478 = vlaneseq
    %v479 = vshrl.u32 %v478, 7
    %v480 = vsub.s32 %v447, %v479
    %v481 = vrot.slane %v477, %v480
    %vm483 = vcmask 8192
    %484 = vst.msk [vmem:[#allocation3] sm:$0x1] %vm483, %v481
    // Predicated region
    $region46: #{tpu_custom_call.1} parent=1 // pred_check
      _
    $region47: #{tpu_custom_call.1} parent=1 // pred_check_branch
      %486 = sbr.rel (0) target = $region49
    $region48: #{tpu_custom_call.1} parent=1 // pred_region
      %s488 = ssub.s32 16, 16
      %489 = vsyncadd [#allocation4], %s488
      %s491 = sshll.u32 [#allocation3], 4
      %s492 = int_to_ptr.vmem [resolvable:$true] %s491
      %494 = dma.vmem_to_hbm [thread:$0]  %s492, 16, %s11, [#allocation4]
    $region49: #{tpu_custom_call.1} parent=1 // pred_fallthru
      _
    // Predicated region
    $region50: #{tpu_custom_call.1} parent=1 // pred_check
      _
    $region51: #{tpu_custom_call.1} parent=1 // pred_check_branch
      %496 = sbr.rel (0) target = $region53
    $region52: #{tpu_custom_call.1} parent=1 // pred_region
      %497 = dma.done [#allocation4], 16
    $region53: #{tpu_custom_call.1} parent=1 // pred_fallthru
      _
    %498 = vsyncpa [#allocation4], 1

</llo_original>
